<compile_context>
chip_gen: v7x
topology: tpu7x:2x2x1
jax: 0.10.0
libtpu: 0.0.40
codegen_flags: <defaults>
</compile_context>

<pallas_src>
import jax
import jax.numpy as jnp
from jax.experimental import pallas as pl
from jax.experimental.pallas import tpu as pltpu


def attack_kernel(x_ref, w1_ref, b1_ref, w2_ref, b2_ref, o_ref):
    # x_ref:  [TILE_B, n]      (input dtype, e.g. f32 or bf16)
    # w1_ref: [n, H_pad]       (input dtype)
    # b1_ref: [1, H_pad]       (f32)
    # w2_ref: [1, H_pad]       (f32, zero-padded rows)
    # b2_ref: [1]              (f32, SMEM scalar)
    # o_ref:  [1, TILE_B]      (lane-dense output row)
    x = x_ref[...]
    h = jnp.dot(x, w1_ref[...], preferred_element_type=jnp.float32)   # [TILE_B, H_pad]
    h = jnp.maximum(h + b1_ref[...], 0.0)                             # bias + ReLU (f32)
    # Second layer as VPU multiply + lane reduction (no N=1 MXU matmul).
    logits = jnp.sum(h * w2_ref[...], axis=-1) + b2_ref[0]            # [TILE_B]
    o_ref[...] = jax.nn.sigmoid(logits).reshape(1, -1).astype(o_ref.dtype)


def attackmodel_forward(x, w1, b1, w2, b2, *, tile_b=512):
    """x: [B, n]; w1: [n, H]; b1: [H]; w2: [H, 1]; b2: [1]  ->  [B] (x.dtype)."""
    B, n = x.shape
    H = w1.shape[1]
    out_dtype = x.dtype

    # --- weight prep (one-time, outside the hot path) ---------------------
    # Pad hidden dim to a full 128-lane tile; zero-padded w2 rows keep the
    # logit exact (relu(pad) * 0 == 0).
    H_pad = ((H + 127) // 128) * 128
    w1p = w1 if H_pad == H else jnp.pad(w1, ((0, 0), (0, H_pad - H)))
    b1p = jnp.pad(b1, (0, H_pad - H)) if H_pad != H else b1
    b1p = b1p.reshape(1, H_pad).astype(jnp.float32)
    w2row = w2.reshape(1, H).astype(jnp.float32)
    w2p = w2row if H_pad == H else jnp.pad(w2row, ((0, 0), (0, H_pad - H)))
    b2s = b2.reshape(1).astype(jnp.float32)

    # --- batch tiling ------------------------------------------------------
    # Lane-dense output wants TILE_B to be a multiple of 128; cap at tile_b
    # (512 default) so 2x double-buffered x tiles stay well inside VMEM.
    TILE_B = min(tile_b, ((B + 127) // 128) * 128)
    B_pad = ((B + TILE_B - 1) // TILE_B) * TILE_B
    xp = x if B_pad == B else jnp.pad(x, ((0, B_pad - B), (0, 0)))
    num_tiles = B_pad // TILE_B

    out = pl.pallas_call(
        attack_kernel,
        out_shape=jax.ShapeDtypeStruct((1, B_pad), out_dtype),
        grid_spec=pltpu.PrefetchScalarGridSpec(
            num_scalar_prefetch=0,
            grid=(num_tiles,),
            in_specs=[
                pl.BlockSpec((TILE_B, n), lambda i: (i, 0)),        # x: streamed
                pl.BlockSpec((n, H_pad), lambda i: (0, 0)),         # w1: resident
                pl.BlockSpec((1, H_pad), lambda i: (0, 0)),         # b1: resident
                pl.BlockSpec((1, H_pad), lambda i: (0, 0)),         # w2 row: resident
                pl.BlockSpec(memory_space=pltpu.MemorySpace.SMEM),  # b2: SMEM scalar
            ],
            out_specs=pl.BlockSpec((1, TILE_B), lambda i: (0, i)),  # lane-dense row
        ),
        compiler_params=pltpu.CompilerParams(
            dimension_semantics=("parallel",),
        ),
    )(xp, w1p, b1p, w2p, b2s)

    # torch.squeeze(..., dim=-1): drop the padded tail and the leading row dim.
    return out[0, :B]


def init_params(key, n, hidden=64):
    """Deterministic init mirroring nn.Linear's U(-1/sqrt(fan_in), 1/sqrt(fan_in))."""
    k1, k2, k3, k4 = jax.random.split(key, 4)
    bound1 = 1.0 / jnp.sqrt(jnp.float32(n))
    bound2 = 1.0 / jnp.sqrt(jnp.float32(hidden))
    w1 = jax.random.uniform(k1, (n, hidden), jnp.float32, -bound1, bound1)
    b1 = jax.random.uniform(k2, (hidden,), jnp.float32, -bound1, bound1)
    w2 = jax.random.uniform(k3, (hidden, 1), jnp.float32, -bound2, bound2)
    b2 = jax.random.uniform(k4, (1,), jnp.float32, -bound2, bound2)
    return w1, b1, w2, b2


if __name__ == "__main__":
    key = jax.random.PRNGKey(0)
    kx1, kx2, kp = jax.random.split(key, 3)

    n = 32
    w1, b1, w2, b2 = init_params(kp, n)

    def reference(x):
        h = jnp.maximum(x @ w1 + b1, 0.0)
        return jax.nn.sigmoid(h @ w2 + b2)[:, 0]

    # Case 1: tiny batch (pads up to a single 128-row tile).
    x1 = jax.random.normal(kx1, (8, n), jnp.float32)
    y1 = jax.block_until_ready(attackmodel_forward(x1, w1, b1, w2, b2))
    assert y1.shape == (8,)
    assert jnp.allclose(y1, reference(x1), atol=1e-5, rtol=1e-5)

    # Case 2: multi-tile batch with ragged tail (exercises grid + parallel axis).
    x2 = jax.random.normal(kx2, (300, n), jnp.float32)
    y2 = jax.block_until_ready(attackmodel_forward(x2, w1, b1, w2, b2, tile_b=128))
    assert y2.shape == (300,)
    assert jnp.allclose(y2, reference(x2), atol=1e-5, rtol=1e-5)

    print("KERNEL_OK")
</pallas_src>

<mosaic_0001>
module attributes {stable_mosaic.version = 11 : i64} {
  func.func @attack_kernel(%arg0: i32, %arg1: memref<128x32xf32, #tpu.memory_space<vmem>>, %arg2: memref<32x128xf32, #tpu.memory_space<vmem>>, %arg3: memref<1x128xf32, #tpu.memory_space<vmem>>, %arg4: memref<1x128xf32, #tpu.memory_space<vmem>>, %arg5: memref<1xf32, #tpu.memory_space<smem>>, %arg6: memref<1x128xf32, #tpu.memory_space<vmem>>) attributes {dimension_semantics = [#tpu.dimension_semantics<parallel>], iteration_bounds = array<i64: 1>, scalar_prefetch = 0 : i64, scratch_operands = 0 : i64, tpu.core_type = #tpu.core_type<tc>, window_params = [{transform_indices = @transform_0, window_bounds = array<i64: 128, 32>}, {pipeline_mode = #tpu.pipeline_mode<synchronous>, transform_indices = @transform_1, window_bounds = array<i64: 32, 128>}, {pipeline_mode = #tpu.pipeline_mode<synchronous>, transform_indices = @transform_2, window_bounds = array<i64: 1, 128>}, {pipeline_mode = #tpu.pipeline_mode<synchronous>, transform_indices = @transform_3, window_bounds = array<i64: 1, 128>}, {transform_indices = @transform_4, window_bounds = array<i64: 1>}, {transform_indices = @transform_5, window_bounds = array<i64: 1, 128>}]} {
    %c0 = arith.constant 0 : index
    %c0_0 = arith.constant 0 : index
    %0 = vector.load %arg1[%c0, %c0_0] : memref<128x32xf32, #tpu.memory_space<vmem>>, vector<128x32xf32>
    %c0_1 = arith.constant 0 : index
    %c0_2 = arith.constant 0 : index
    %1 = vector.load %arg2[%c0_1, %c0_2] : memref<32x128xf32, #tpu.memory_space<vmem>>, vector<32x128xf32>
    %cst = arith.constant dense<0.000000e+00> : vector<128x128xf32>
    %2 = tpu.matmul %0, %1, %cst {dimension_numbers = #tpu.dot_dimension_numbers<[1], [0], [0], [1], [0, 0, 1, 1], [], []>} : vector<128x32xf32>, vector<32x128xf32>, vector<128x128xf32> -> vector<128x128xf32>
    %c0_3 = arith.constant 0 : index
    %c0_4 = arith.constant 0 : index
    %3 = vector.load %arg3[%c0_3, %c0_4] : memref<1x128xf32, #tpu.memory_space<vmem>>, vector<1x128xf32>
    %4 = vector.broadcast %3 : vector<1x128xf32> to vector<128x128xf32>
    %5 = arith.addf %2, %4 : vector<128x128xf32>
    %cst_5 = arith.constant 0.000000e+00 : f32
    %6 = vector.broadcast %cst_5 : f32 to vector<128x128xf32>
    %7 = arith.maximumf %5, %6 : vector<128x128xf32>
    %c0_6 = arith.constant 0 : index
    %c0_7 = arith.constant 0 : index
    %8 = vector.load %arg4[%c0_6, %c0_7] : memref<1x128xf32, #tpu.memory_space<vmem>>, vector<1x128xf32>
    %9 = vector.broadcast %8 : vector<1x128xf32> to vector<128x128xf32>
    %10 = arith.mulf %7, %9 : vector<128x128xf32>
    %cst_8 = arith.constant dense<0.000000e+00> : vector<128xf32>
    %11 = vector.multi_reduction <add>, %10, %cst_8 [1] : vector<128x128xf32> to vector<128xf32>
    %c0_9 = arith.constant 0 : index
    %12 = memref.load %arg5[%c0_9] : memref<1xf32, #tpu.memory_space<smem>>
    %13 = vector.broadcast %12 : f32 to vector<128xf32>
    %14 = arith.addf %11, %13 : vector<128xf32>
    %15 = arith.negf %14 : vector<128xf32>
    %16 = math.exp %15 : vector<128xf32>
    %cst_10 = arith.constant 1.000000e+00 : f32
    %17 = vector.broadcast %cst_10 : f32 to vector<128xf32>
    %18 = arith.addf %17, %16 : vector<128xf32>
    %19 = arith.divf %17, %18 : vector<128xf32>
    %20 = vector.shape_cast %19 : vector<128xf32> to vector<1x128xf32>
    %c0_11 = arith.constant 0 : index
    %c0_12 = arith.constant 0 : index
    %21 = vector.load %arg6[%c0_11, %c0_12] : memref<1x128xf32, #tpu.memory_space<vmem>>, vector<1x128xf32>
    tpu.vector_store %arg6[%c0_11, %c0_12], %20 {strides = array<i32>} : memref<1x128xf32, #tpu.memory_space<vmem>>, vector<1x128xf32>,
    return
  }
  func.func @transform_0(%arg0: i32) -> (i32, i32) {
    %c0_i32 = arith.constant 0 : i32
    %c0_i32_0 = arith.constant 0 : i32
    return %arg0, %c0_i32 : i32, i32
  }
  func.func @transform_1(%arg0: i32) -> (i32, i32) {
    %c0_i32 = arith.constant 0 : i32
    %c0_i32_0 = arith.constant 0 : i32
    %c0_i32_1 = arith.constant 0 : i32
    return %c0_i32, %c0_i32_0 : i32, i32
  }
  func.func @transform_2(%arg0: i32) -> (i32, i32) {
    %c0_i32 = arith.constant 0 : i32
    %c0_i32_0 = arith.constant 0 : i32
    %c0_i32_1 = arith.constant 0 : i32
    return %c0_i32, %c0_i32_0 : i32, i32
  }
  func.func @transform_3(%arg0: i32) -> (i32, i32) {
    %c0_i32 = arith.constant 0 : i32
    %c0_i32_0 = arith.constant 0 : i32
    %c0_i32_1 = arith.constant 0 : i32
    return %c0_i32, %c0_i32_0 : i32, i32
  }
  func.func @transform_4(%arg0: i32) -> i32 {
    %c0_i32 = arith.constant 0 : i32
    %c0_i32_0 = arith.constant 0 : i32
    return %c0_i32 : i32
  }
  func.func @transform_5(%arg0: i32) -> (i32, i32) {
    %c0_i32 = arith.constant 0 : i32
    %c0_i32_0 = arith.constant 0 : i32
    return %c0_i32, %arg0 : i32, i32
  }
}

</mosaic_0001>

<llo_original>
// kernel: tpu_custom_call.1
$region0: #{tpu_custom_call.1}
  #allocation0 [shape = 'u32[]', space=smem, size = 0x4, offset = 0x4, fixed_abs, tag = 'smem constant byte address 0x4 - core index']
  #allocation1 [shape = 'u32[144,128]{1,0:T(1,128)}', space=vmem, size = 0x12000, scoped, tag = 'internal scratch']
  #allocation2 [shape = 'f32[1]{0:T(128)S(6)}', space=smem, size = 0x200, scoped, tag = 'scoped memory for tpu_custom_call.1']
  %s0 = inlined_call_operand.vmem [shape: f32[128,32], index: 0, kind: input, shape index: {}]
  %s1 = inlined_call_operand.vmem [shape: f32[32,128], index: 1, kind: input, shape index: {}]
  %s2 = inlined_call_operand.vmem [shape: f32[1,128], index: 2, kind: input, shape index: {}]
  %s3 = inlined_call_operand.vmem [shape: f32[1,128], index: 3, kind: input, shape index: {}]
  %s4 = inlined_call_operand.<no memory space> [shape: f32[1], index: 4, kind: input, shape index: {}]
  %s5 = inlined_call_operand.hbm [shape: f32[1,128], index: 5, kind: output, shape index: {}]
  %s6 = sld [smem:[#allocation0]]
  $region30: #{tpu_custom_call.1} parent=0
    _
  %s8 = ssub.s32 1, %s6
  %s9 = scalar_select 0, %s8, %s6
  %10 = sst [smem:[#allocation2]] %s4
  $region1: #{tpu_custom_call.1} parent=0
    #allocation3 [shape = 'u8[512]{0}', space=vmem, size = 0x400, scoped, tag = 'output window, operand 0, single buffered']
    #allocation4 [shape = 's32[1]{0}', space=sflag, size = 0x4, scoped, tag = 'scoped memory for tpu_custom_call.1']
    %11 = vsyncpa [#allocation4], 0
    // Predicated region
    $region2: #{tpu_custom_call.1} parent=1 // pred_check
      _
    $region3: #{tpu_custom_call.1} parent=1 // pred_check_branch
      %13 = sbr.rel (0) target = $region5
    $region4: #{tpu_custom_call.1} parent=1 // pred_region
      _
    $region5: #{tpu_custom_call.1} parent=1 // pred_fallthru
      _
    // Predicated region
    $region6: #{tpu_custom_call.1} parent=1 // pred_check
      _
    $region7: #{tpu_custom_call.1} parent=1 // pred_check_branch
      %15 = sbr.rel (0) target = $region9
    $region8: #{tpu_custom_call.1} parent=1 // pred_region
      _
    $region9: #{tpu_custom_call.1} parent=1 // pred_fallthru
      _
    // Predicated region
    $region10: #{tpu_custom_call.1} parent=1 // pred_check
      _
    $region11: #{tpu_custom_call.1} parent=1 // pred_check_branch
      %17 = sbr.rel (0) target = $region13
    $region12: #{tpu_custom_call.1} parent=1 // pred_region
      _
    $region13: #{tpu_custom_call.1} parent=1 // pred_fallthru
      _
    // Predicated region
    $region14: #{tpu_custom_call.1} parent=1 // pred_check
      _
    $region15: #{tpu_custom_call.1} parent=1 // pred_check_branch
      %19 = sbr.rel (0) target = $region17
    $region16: #{tpu_custom_call.1} parent=1 // pred_region
      _
    $region17: #{tpu_custom_call.1} parent=1 // pred_fallthru
      _
    // Predicated region
    $region18: #{tpu_custom_call.1} parent=1 // pred_check
      _
    $region19: #{tpu_custom_call.1} parent=1 // pred_check_branch
      %21 = sbr.rel (0) target = $region21
    $region20: #{tpu_custom_call.1} parent=1 // pred_region
      _
    $region21: #{tpu_custom_call.1} parent=1 // pred_fallthru
      _
    %v22 = vld [vmem:[%s0] sm:$0xff]
    %v23 = vld [vmem:[%s0 + $0x8] sm:$0xff]
    %v24 = vld [vmem:[%s0 + $0x10] sm:$0xff]
    %v25 = vld [vmem:[%s0 + $0x18] sm:$0xff]
    %v26 = vld [vmem:[%s0 + $0x20] sm:$0xff]
    %v27 = vld [vmem:[%s0 + $0x28] sm:$0xff]
    %v28 = vld [vmem:[%s0 + $0x30] sm:$0xff]
    %v29 = vld [vmem:[%s0 + $0x38] sm:$0xff]
    %v30 = vld [vmem:[%s0 + $0x40] sm:$0xff]
    %v31 = vld [vmem:[%s0 + $0x48] sm:$0xff]
    %v32 = vld [vmem:[%s0 + $0x50] sm:$0xff]
    %v33 = vld [vmem:[%s0 + $0x58] sm:$0xff]
    %v34 = vld [vmem:[%s0 + $0x60] sm:$0xff]
    %v35 = vld [vmem:[%s0 + $0x68] sm:$0xff]
    %v36 = vld [vmem:[%s0 + $0x70] sm:$0xff]
    %v37 = vld [vmem:[%s0 + $0x78] sm:$0xff]
    %v38 = vld [vmem:[%s1] sm:$0xff]
    %v39 = vld [vmem:[%s1 + $0x8] sm:$0xff]
    %v40 = vld [vmem:[%s1 + $0x10] sm:$0xff]
    %v41 = vld [vmem:[%s1 + $0x18] sm:$0xff]
    %v42 = vld [vmem:[%s2] sm:$0x1]
    %v44 = vlaneseq
    %v45 = vshrl.u32 %v44, 7
    %v46 = vsub.s32 0, %v45
    %v47 = vrot.slane %v42, %v46
    %vm49 = vcmask 261120
    %v51 = vsel %vm49, %v22, 0
    %v54 = vsel %vm49, %v23, 0
    %v57 = vsel %vm49, %v24, 0
    %v60 = vsel %vm49, %v25, 0
    %v63 = vsel %vm49, %v26, 0
    %v66 = vsel %vm49, %v27, 0
    %v69 = vsel %vm49, %v28, 0
    %v72 = vsel %vm49, %v29, 0
    %v75 = vsel %vm49, %v30, 0
    %v78 = vsel %vm49, %v31, 0
    %v81 = vsel %vm49, %v32, 0
    %v84 = vsel %vm49, %v33, 0
    %v87 = vsel %vm49, %v34, 0
    %v90 = vsel %vm49, %v35, 0
    %v93 = vsel %vm49, %v36, 0
    %v96 = vsel %vm49, %v37, 0
    %98 = vmatprep.subr.mxu0 0.0
    %99 = vmatpush1.msra.mxu0 %v38
    %100 = vmatprep.subr.mxu0 0.0
    %101 = vmatpush1.msra.mxu0 %v39
    %102 = vmatprep.subr.mxu0 0.0
    %103 = vmatpush1.msra.mxu0 %v40
    %104 = vmatprep.subr.mxu0 0.0
    %105 = vmatpush1.msra.mxu0 %v41
    %106 = vmatprep.subr.mxu0 0.0
    %107 = vmatpush1.msra.mxu0 0.0
    %108 = vmatprep.subr.mxu0 0.0
    %109 = vmatpush1.msra.mxu0 0.0
    %110 = vmatprep.subr.mxu0 0.0
    %111 = vmatpush1.msra.mxu0 0.0
    %112 = vmatprep.subr.mxu0 0.0
    %113 = vmatpush1.msra.mxu0 0.0
    %114 = vmatprep.subr.mxu0 0.0
    %115 = vmatpush1.msra.mxu0 0.0
    %116 = vmatprep.subr.mxu0 0.0
    %117 = vmatpush1.msra.mxu0 0.0
    %118 = vmatprep.subr.mxu0 0.0
    %119 = vmatpush1.msra.mxu0 0.0
    %120 = vmatprep.subr.mxu0 0.0
    %121 = vmatpush1.msra.mxu0 0.0
    %122 = vmatprep.subr.mxu0 0.0
    %123 = vmatpush1.msra.mxu0 0.0
    %124 = vmatprep.subr.mxu0 0.0
    %125 = vmatpush1.msra.mxu0 0.0
    %126 = vmatprep.subr.mxu0 0.0
    %127 = vmatpush1.msra.mxu0 0.0
    %128 = vmatprep.subr.mxu0 0.0
    %129 = vmatpush1.msra.mxu0 0.0
    %130 = vmatprep.subr.mxu0 0.0
    %131 = vmatpush1.msra.mxu0 0.0
    %132 = vmatprep.subr.mxu0 0.0
    %133 = vmatpush1.msra.mxu0 0.0
    %134 = vmatprep.subr.mxu0 0.0
    %135 = vmatpush1.msra.mxu0 0.0
    %136 = vmatprep.subr.mxu0 0.0
    %137 = vmatpush1.msra.mxu0 0.0
    %138 = vmatprep.subr.mxu0 0.0
    %139 = vmatpush1.msra.mxu0 0.0
    %140 = vmatprep.subr.mxu0 0.0
    %141 = vmatpush1.msra.mxu0 0.0
    %142 = vmatprep.subr.mxu0 0.0
    %143 = vmatpush1.msra.mxu0 0.0
    %144 = vmatprep.subr.mxu0 0.0
    %145 = vmatpush1.msra.mxu0 0.0
    %146 = vmatprep.subr.mxu0 0.0
    %147 = vmatpush1.msra.mxu0 0.0
    %148 = vmatprep.subr.mxu0 0.0
    %149 = vmatpush1.msra.mxu0 0.0
    %150 = vmatprep.subr.mxu0 0.0
    %151 = vmatpush1.msra.mxu0 0.0
    %152 = vmatprep.subr.mxu0 0.0
    %153 = vmatpush1.msra.mxu0 0.0
    %154 = vmatprep.subr.mxu0 0.0
    %155 = vmatpush1.msra.mxu0 0.0
    %156 = vmatprep.subr.mxu0 0.0
    %157 = vmatpush1.msra.mxu0 0.0
    %158 = vmatprep.subr.mxu0 0.0
    %159 = vmatpush1.msra.mxu0 0.0
    %160 = vmatprep.subr.mxu0 0.0
    %161 = vmatpush1.msra.mxu0 0.0
    %162 = vmatprep.mubr.f32.mxu0 0.0
    %163 = vmatmul.mubr.f32.gmra.mrb[0].mxu0 %v51
    %v164 = vpop.f32.mrb[0].mxu0
    %v165 = vadd.f32 %v47, %v164
    %v166 = vpop.f32.mrb[0].mxu0
    %167 = vmatprep.mubr.f32.mxu0 0.0
    %168 = vmatmul.mubr.f32.gmra.mrb[0].mxu0 %v54
    %v169 = vpop.f32.mrb[0].mxu0
    %v170 = vadd.f32 %v47, %v169
    %v171 = vpop.f32.mrb[0].mxu0
    %172 = vmatprep.mubr.f32.mxu0 0.0
    %173 = vmatmul.mubr.f32.gmra.mrb[0].mxu0 %v57
    %v174 = vpop.f32.mrb[0].mxu0
    %v175 = vadd.f32 %v47, %v174
    %v176 = vpop.f32.mrb[0].mxu0
    %177 = vmatprep.mubr.f32.mxu0 0.0
    %178 = vmatmul.mubr.f32.gmra.mrb[0].mxu0 %v60
    %v179 = vpop.f32.mrb[0].mxu0
    %v180 = vadd.f32 %v47, %v179
    %v181 = vpop.f32.mrb[0].mxu0
    %182 = vmatprep.mubr.f32.mxu0 0.0
    %183 = vmatmul.mubr.f32.gmra.mrb[0].mxu0 %v63
    %v184 = vpop.f32.mrb[0].mxu0
    %v185 = vadd.f32 %v47, %v184
    %v186 = vpop.f32.mrb[0].mxu0
    %187 = vmatprep.mubr.f32.mxu0 0.0
    %188 = vmatmul.mubr.f32.gmra.mrb[0].mxu0 %v66
    %v189 = vpop.f32.mrb[0].mxu0
    %v190 = vadd.f32 %v47, %v189
    %v191 = vpop.f32.mrb[0].mxu0
    %192 = vmatprep.mubr.f32.mxu0 0.0
    %193 = vmatmul.mubr.f32.gmra.mrb[0].mxu0 %v69
    %v194 = vpop.f32.mrb[0].mxu0
    %v195 = vadd.f32 %v47, %v194
    %v196 = vpop.f32.mrb[0].mxu0
    %197 = vmatprep.mubr.f32.mxu0 0.0
    %198 = vmatmul.mubr.f32.gmra.mrb[0].mxu0 %v72
    %v199 = vpop.f32.mrb[0].mxu0
    %v200 = vadd.f32 %v47, %v199
    %v201 = vpop.f32.mrb[0].mxu0
    %202 = vmatprep.mubr.f32.mxu0 0.0
    %203 = vmatmul.mubr.f32.gmra.mrb[0].mxu0 %v75
    %v204 = vpop.f32.mrb[0].mxu0
    %v205 = vadd.f32 %v47, %v204
    %v206 = vpop.f32.mrb[0].mxu0
    %207 = vmatprep.mubr.f32.mxu0 0.0
    %208 = vmatmul.mubr.f32.gmra.mrb[0].mxu0 %v78
    %v209 = vpop.f32.mrb[0].mxu0
    %v210 = vadd.f32 %v47, %v209
    %v211 = vpop.f32.mrb[0].mxu0
    %212 = vmatprep.mubr.f32.mxu0 0.0
    %213 = vmatmul.mubr.f32.gmra.mrb[0].mxu0 %v81
    %v214 = vpop.f32.mrb[0].mxu0
    %v215 = vadd.f32 %v47, %v214
    %v216 = vpop.f32.mrb[0].mxu0
    %217 = vmatprep.mubr.f32.mxu0 0.0
    %218 = vmatmul.mubr.f32.gmra.mrb[0].mxu0 %v84
    %v219 = vpop.f32.mrb[0].mxu0
    %v220 = vadd.f32 %v47, %v219
    %v221 = vpop.f32.mrb[0].mxu0
    %222 = vmatprep.mubr.f32.mxu0 0.0
    %223 = vmatmul.mubr.f32.gmra.mrb[0].mxu0 %v87
    %v224 = vpop.f32.mrb[0].mxu0
    %v225 = vadd.f32 %v47, %v224
    %v226 = vpop.f32.mrb[0].mxu0
    %227 = vmatprep.mubr.f32.mxu0 0.0
    %228 = vmatmul.mubr.f32.gmra.mrb[0].mxu0 %v90
    %v229 = vpop.f32.mrb[0].mxu0
    %v230 = vadd.f32 %v47, %v229
    %v231 = vpop.f32.mrb[0].mxu0
    %232 = vmatprep.mubr.f32.mxu0 0.0
    %233 = vmatmul.mubr.f32.gmra.mrb[0].mxu0 %v93
    %v234 = vpop.f32.mrb[0].mxu0
    %v235 = vadd.f32 %v47, %v234
    %v236 = vpop.f32.mrb[0].mxu0
    %237 = vmatprep.mubr.f32.mxu0 0.0
    %238 = vmatmul.mubr.f32.gmra.mrb[0].mxu0 %v96
    %v239 = vpop.f32.mrb[0].mxu0
    %v240 = vadd.f32 %v47, %v239
    %v241 = vpop.f32.mrb[0].mxu0
    %242 = vdwg.mxu0
    %v243 = vmax.f32 %v165, 0.0
    %v244 = vmax.f32 %v170, 0.0
    %v245 = vmax.f32 %v175, 0.0
    %v246 = vmax.f32 %v180, 0.0
    %v247 = vmax.f32 %v185, 0.0
    %v248 = vmax.f32 %v190, 0.0
    %v249 = vmax.f32 %v195, 0.0
    %v250 = vmax.f32 %v200, 0.0
    %v251 = vmax.f32 %v205, 0.0
    %v252 = vmax.f32 %v210, 0.0
    %v253 = vmax.f32 %v215, 0.0
    %v254 = vmax.f32 %v220, 0.0
    %v255 = vmax.f32 %v225, 0.0
    %v256 = vmax.f32 %v230, 0.0
    %v257 = vmax.f32 %v235, 0.0
    %v258 = vmax.f32 %v240, 0.0
    %v259 = vld [vmem:[%s3] sm:$0x1]
    %v261 = vlaneseq
    %v262 = vshrl.u32 %v261, 7
    %v263 = vsub.s32 0, %v262
    %v264 = vrot.slane %v259, %v263
    %v266 = vmul.f32 %v243, %v264
    %v267 = vmul.f32 %v244, %v264
    %v268 = vmul.f32 %v245, %v264
    %v269 = vmul.f32 %v246, %v264
    %v270 = vmul.f32 %v247, %v264
    %v271 = vmul.f32 %v248, %v264
    %v272 = vmul.f32 %v249, %v264
    %v273 = vmul.f32 %v250, %v264
    %v274 = vmul.f32 %v251, %v264
    %v275 = vmul.f32 %v252, %v264
    %v276 = vmul.f32 %v253, %v264
    %v277 = vmul.f32 %v254, %v264
    %v278 = vmul.f32 %v255, %v264
    %v279 = vmul.f32 %v256, %v264
    %v280 = vmul.f32 %v257, %v264
    %v281 = vmul.f32 %v258, %v264
    %282 = vadd.xlane.f32.xlu0 %v266
    %v283 = vpop.xlane.xlu0 %282
    %284 = vadd.xlane.f32.xlu0 %v267
    %v285 = vpop.xlane.xlu0 %284
    %286 = vadd.xlane.f32.xlu0 %v268
    %v287 = vpop.xlane.xlu0 %286
    %288 = vadd.xlane.f32.xlu0 %v269
    %v289 = vpop.xlane.xlu0 %288
    %290 = vadd.xlane.f32.xlu0 %v270
    %v291 = vpop.xlane.xlu0 %290
    %292 = vadd.xlane.f32.xlu0 %v271
    %v293 = vpop.xlane.xlu0 %292
    %294 = vadd.xlane.f32.xlu0 %v272
    %v295 = vpop.xlane.xlu0 %294
    %296 = vadd.xlane.f32.xlu0 %v273
    %v297 = vpop.xlane.xlu0 %296
    %298 = vadd.xlane.f32.xlu0 %v274
    %v299 = vpop.xlane.xlu0 %298
    %300 = vadd.xlane.f32.xlu0 %v275
    %v301 = vpop.xlane.xlu0 %300
    %302 = vadd.xlane.f32.xlu0 %v276
    %v303 = vpop.xlane.xlu0 %302
    %304 = vadd.xlane.f32.xlu0 %v277
    %v305 = vpop.xlane.xlu0 %304
    %306 = vadd.xlane.f32.xlu0 %v278
    %v307 = vpop.xlane.xlu0 %306
    %308 = vadd.xlane.f32.xlu0 %v279
    %v309 = vpop.xlane.xlu0 %308
    %310 = vadd.xlane.f32.xlu0 %v280
    %v311 = vpop.xlane.xlu0 %310
    %312 = vadd.xlane.f32.xlu0 %v281
    %v313 = vpop.xlane.xlu0 %312
    %s314 = sld [smem:[#allocation2]]
    %v315 = vstv %s314
    %v316 = vadd.f32 %v283, %v315
    %v317 = vadd.f32 %v285, %v315
    %v318 = vadd.f32 %v287, %v315
    %v319 = vadd.f32 %v289, %v315
    %v320 = vadd.f32 %v291, %v315
    %v321 = vadd.f32 %v293, %v315
    %v322 = vadd.f32 %v295, %v315
    %v323 = vadd.f32 %v297, %v315
    %v324 = vadd.f32 %v299, %v315
    %v325 = vadd.f32 %v301, %v315
    %v326 = vadd.f32 %v303, %v315
    %v327 = vadd.f32 %v305, %v315
    %v328 = vadd.f32 %v307, %v315
    %v329 = vadd.f32 %v309, %v315
    %v330 = vadd.f32 %v311, %v315
    %v331 = vadd.f32 %v313, %v315
    %v332 = vxor.u32 %v316, 2147483648
    %v333 = vxor.u32 %v317, 2147483648
    %v334 = vxor.u32 %v318, 2147483648
    %v335 = vxor.u32 %v319, 2147483648
    %v336 = vxor.u32 %v320, 2147483648
    %v337 = vxor.u32 %v321, 2147483648
    %v338 = vxor.u32 %v322, 2147483648
    %v339 = vxor.u32 %v323, 2147483648
    %v340 = vxor.u32 %v324, 2147483648
    %v341 = vxor.u32 %v325, 2147483648
    %v342 = vxor.u32 %v326, 2147483648
    %v343 = vxor.u32 %v327, 2147483648
    %v344 = vxor.u32 %v328, 2147483648
    %v345 = vxor.u32 %v329, 2147483648
    %v346 = vxor.u32 %v330, 2147483648
    %v347 = vxor.u32 %v331, 2147483648
    %v348 = vmul.f32 %v332, 1.442695
    %v349 = vpow.pop %v348
    %v350 = vmul.f32 %v333, 1.442695
    %v351 = vpow.pop %v350
    %v352 = vmul.f32 %v334, 1.442695
    %v353 = vpow.pop %v352
    %v354 = vmul.f32 %v335, 1.442695
    %v355 = vpow.pop %v354
    %v356 = vmul.f32 %v336, 1.442695
    %v357 = vpow.pop %v356
    %v358 = vmul.f32 %v337, 1.442695
    %v359 = vpow.pop %v358
    %v360 = vmul.f32 %v338, 1.442695
    %v361 = vpow.pop %v360
    %v362 = vmul.f32 %v339, 1.442695
    %v363 = vpow.pop %v362
    %v364 = vmul.f32 %v340, 1.442695
    %v365 = vpow.pop %v364
    %v366 = vmul.f32 %v341, 1.442695
    %v367 = vpow.pop %v366
    %v368 = vmul.f32 %v342, 1.442695
    %v369 = vpow.pop %v368
    %v370 = vmul.f32 %v343, 1.442695
    %v371 = vpow.pop %v370
    %v372 = vmul.f32 %v344, 1.442695
    %v373 = vpow.pop %v372
    %v374 = vmul.f32 %v345, 1.442695
    %v375 = vpow.pop %v374
    %v376 = vmul.f32 %v346, 1.442695
    %v377 = vpow.pop %v376
    %v378 = vmul.f32 %v347, 1.442695
    %v379 = vpow.pop %v378
    %v380 = vadd.f32 %v349, 1.0
    %v381 = vadd.f32 %v351, 1.0
    %v382 = vadd.f32 %v353, 1.0
    %v383 = vadd.f32 %v355, 1.0
    %v384 = vadd.f32 %v357, 1.0
    %v385 = vadd.f32 %v359, 1.0
    %v386 = vadd.f32 %v361, 1.0
    %v387 = vadd.f32 %v363, 1.0
    %v388 = vadd.f32 %v365, 1.0
    %v389 = vadd.f32 %v367, 1.0
    %v390 = vadd.f32 %v369, 1.0
    %v391 = vadd.f32 %v371, 1.0
    %v392 = vadd.f32 %v373, 1.0
    %v393 = vadd.f32 %v375, 1.0
    %v394 = vadd.f32 %v377, 1.0
    %v395 = vadd.f32 %v379, 1.0
    %v396 = vrcp.pop %v380
    %v397 = vmul.f32 1.0, %v396
    %v398 = vrcp.pop %v381
    %v399 = vmul.f32 1.0, %v398
    %v400 = vrcp.pop %v382
    %v401 = vmul.f32 1.0, %v400
    %v402 = vrcp.pop %v383
    %v403 = vmul.f32 1.0, %v402
    %v404 = vrcp.pop %v384
    %v405 = vmul.f32 1.0, %v404
    %v406 = vrcp.pop %v385
    %v407 = vmul.f32 1.0, %v406
    %v408 = vrcp.pop %v386
    %v409 = vmul.f32 1.0, %v408
    %v410 = vrcp.pop %v387
    %v411 = vmul.f32 1.0, %v410
    %v412 = vrcp.pop %v388
    %v413 = vmul.f32 1.0, %v412
    %v414 = vrcp.pop %v389
    %v415 = vmul.f32 1.0, %v414
    %v416 = vrcp.pop %v390
    %v417 = vmul.f32 1.0, %v416
    %v418 = vrcp.pop %v391
    %v419 = vmul.f32 1.0, %v418
    %v420 = vrcp.pop %v392
    %v421 = vmul.f32 1.0, %v420
    %v422 = vrcp.pop %v393
    %v423 = vmul.f32 1.0, %v422
    %v424 = vrcp.pop %v394
    %v425 = vmul.f32 1.0, %v424
    %v426 = vrcp.pop %v395
    %v427 = vmul.f32 1.0, %v426
    %v444 = vlaneseq
    %v445 = vand.u32 %v444, 127
    %v446 = vlaneseq
    %v447 = vshrl.u32 %v446, 7
    %v448 = vsub.s32 %v445, %v447
    %v449 = vrot.slane %v397, %v448
    %v450 = vadd.s32 %v445, 4294967288
    %v451 = vlaneseq
    %v452 = vshrl.u32 %v451, 7
    %v453 = vsub.s32 %v450, %v452
    %v454 = vrot.slane %v399, %v453
    %vm455 = vcmask 130112
    %v456 = vsel %vm455, %v454, %v449
    %v457 = vadd.s32 %v445, 4294967280
    %v458 = vlaneseq
    %v459 = vshrl.u32 %v458, 7
    %v460 = vsub.s32 %v457, %v459
    %v461 = vrot.slane %v401, %v460
    %vm462 = vcmask 195712
    %v463 = vsel %vm462, %v461, %v456
    %v464 = vadd.s32 %v445, 4294967272
    %v465 = vlaneseq
    %v466 = vshrl.u32 %v465, 7
    %v467 = vsub.s32 %v464, %v466
    %v468 = vrot.slane %v403, %v467
    %vm469 = vcmask 261312
    %v470 = vsel %vm469, %v468, %v463
    %v471 = vadd.s32 %v445, 4294967264
    %v472 = vlaneseq
    %v473 = vshrl.u32 %v472, 7
    %v474 = vsub.s32 %v471, %v473
    %v475 = vrot.slane %v405, %v474
    %vm476 = vcmask 326912
    %v477 = vsel %vm476, %v475, %v470
    %v478 = vadd.s32 %v445, 4294967256
    %v479 = vlaneseq
    %v480 = vshrl.u32 %v479, 7
    %v481 = vsub.s32 %v478, %v480
    %v482 = vrot.slane %v407, %v481
    %vm483 = vcmask 392512
    %v484 = vsel %vm483, %v482, %v477
    %v485 = vadd.s32 %v445, 4294967248
    %v486 = vlaneseq
    %v487 = vshrl.u32 %v486, 7
    %v488 = vsub.s32 %v485, %v487
    %v489 = vrot.slane %v409, %v488
    %vm490 = vcmask 458112
    %v491 = vsel %vm490, %v489, %v484
    %v492 = vadd.s32 %v445, 4294967240
    %v493 = vlaneseq
    %v494 = vshrl.u32 %v493, 7
    %v495 = vsub.s32 %v492, %v494
    %v496 = vrot.slane %v411, %v495
    %vm497 = vcmask 523712
    %v498 = vsel %vm497, %v496, %v491
    %v499 = vadd.s32 %v445, 4294967232
    %v500 = vlaneseq
    %v501 = vshrl.u32 %v500, 7
    %v502 = vsub.s32 %v499, %v501
    %v503 = vrot.slane %v413, %v502
    %vm504 = vcmask 589312
    %v505 = vsel %vm504, %v503, %v498
    %v506 = vadd.s32 %v445, 4294967224
    %v507 = vlaneseq
    %v508 = vshrl.u32 %v507, 7
    %v509 = vsub.s32 %v506, %v508
    %v510 = vrot.slane %v415, %v509
    %vm511 = vcmask 654912
    %v512 = vsel %vm511, %v510, %v505
    %v513 = vadd.s32 %v445, 4294967216
    %v514 = vlaneseq
    %v515 = vshrl.u32 %v514, 7
    %v516 = vsub.s32 %v513, %v515
    %v517 = vrot.slane %v417, %v516
    %vm518 = vcmask 720512
    %v519 = vsel %vm518, %v517, %v512
    %v520 = vadd.s32 %v445, 4294967208
    %v521 = vlaneseq
    %v522 = vshrl.u32 %v521, 7
    %v523 = vsub.s32 %v520, %v522
    %v524 = vrot.slane %v419, %v523
    %vm525 = vcmask 786112
    %v526 = vsel %vm525, %v524, %v519
    %v527 = vadd.s32 %v445, 4294967200
    %v528 = vlaneseq
    %v529 = vshrl.u32 %v528, 7
    %v530 = vsub.s32 %v527, %v529
    %v531 = vrot.slane %v421, %v530
    %vm532 = vcmask 851712
    %v533 = vsel %vm532, %v531, %v526
    %v534 = vadd.s32 %v445, 4294967192
    %v535 = vlaneseq
    %v536 = vshrl.u32 %v535, 7
    %v537 = vsub.s32 %v534, %v536
    %v538 = vrot.slane %v423, %v537
    %vm539 = vcmask 917312
    %v540 = vsel %vm539, %v538, %v533
    %v541 = vadd.s32 %v445, 4294967184
    %v542 = vlaneseq
    %v543 = vshrl.u32 %v542, 7
    %v544 = vsub.s32 %v541, %v543
    %v545 = vrot.slane %v425, %v544
    %vm546 = vcmask 982912
    %v547 = vsel %vm546, %v545, %v540
    %v548 = vadd.s32 %v445, 4294967176
    %v549 = vlaneseq
    %v550 = vshrl.u32 %v549, 7
    %v551 = vsub.s32 %v548, %v550
    %v552 = vrot.slane %v427, %v551
    %vm553 = vcmask 1048512
    %v554 = vsel %vm553, %v552, %v547
    %556 = vst [vmem:[#allocation3] sm:$0x1] %v554
    // Predicated region
    $region22: #{tpu_custom_call.1} parent=1 // pred_check
      _
    $region23: #{tpu_custom_call.1} parent=1 // pred_check_branch
      %558 = sbr.rel (0) target = $region25
    $region24: #{tpu_custom_call.1} parent=1 // pred_region
      %s560 = ssub.s32 16, 16
      %561 = vsyncadd [#allocation4], %s560
      %s563 = sshll.u32 [#allocation3], 4
      %s564 = int_to_ptr.vmem [resolvable:$true] %s563
      %566 = dma.vmem_to_hbm [thread:$0]  %s564, 16, %s5, [#allocation4]
    $region25: #{tpu_custom_call.1} parent=1 // pred_fallthru
      _
    // Predicated region
    $region26: #{tpu_custom_call.1} parent=1 // pred_check
      _
    $region27: #{tpu_custom_call.1} parent=1 // pred_check_branch
      %568 = sbr.rel (0) target = $region29
    $region28: #{tpu_custom_call.1} parent=1 // pred_region
      %569 = dma.done [#allocation4], 16
    $region29: #{tpu_custom_call.1} parent=1 // pred_fallthru
      _
    %570 = vsyncpa [#allocation4], 1

</llo_original>
